<compile_context>
chip_gen: v7x
topology: tpu7x:2x2x1
jax: 0.10.0
libtpu: 0.0.40
codegen_flags: <defaults>
</compile_context>

<pallas_src>
import math

import jax
import jax.numpy as jnp
from jax.experimental import pallas as pl
from jax.experimental.pallas import tpu as pltpu


def layerscale_kernel(x_ref, g_ref, o_ref):
    # Upcast the tile to f32 in-register (PyTorch-style fp32 promotion for
    # bf16/fp16 inputs), multiply by f32 gamma on the VPU, cast back on store.
    x = x_ref[...].astype(jnp.float32)
    o_ref[...] = (x * g_ref[...]).astype(o_ref.dtype)


def _tpu_generation():
    """Best-effort TPU generation tag: 'v5e' | 'v6e' | 'v7x' | None."""
    try:
        kind = jax.devices()[0].device_kind.lower()
    except Exception:
        return None
    if "v5" in kind:
        return "v5e"
    if "v6" in kind:
        return "v6e"
    if "v7" in kind:
        return "v7x"
    return None


# Per-generation block-size targets (bytes of x per block).
_GEN_BLOCK_BYTES = {"v5e": 2 << 20, "v6e": 4 << 20, "v7x": 6 << 20}
_DEFAULT_BLOCK_BYTES = 2 << 20
# Cap on the lcm-folded lane width so odd/large D can't blow VMEM.
_MAX_FOLD_LANE_BYTES = 512 * 1024


def layer_scale(x, gamma, *, target_block_bytes=None, min_blocks=None):
    """Apply LayerScale: x * gamma along the last axis.

    x: (..., D) array; gamma: (D,) array.  Output dtype == x.dtype; the
    product itself is computed in float32.
    """
    orig_shape = x.shape
    D = orig_shape[-1]
    out_dtype = x.dtype
    itemsize = x.dtype.itemsize
    gamma = jnp.asarray(gamma).astype(jnp.float32)

    gen = _tpu_generation()
    if target_block_bytes is None:
        target_block_bytes = _GEN_BLOCK_BYTES.get(gen, _DEFAULT_BLOCK_BYTES)
    if min_blocks is None:
        # v7x has 2 TensorCores: keep >= 8 grid steps so the parallel axis
        # can shard across both cores even for small/mid tensors.
        min_blocks = 8 if gen == "v7x" else 1

    total = x.size

    # --- choose a lane-dense last dim -------------------------------------
    if D % 128 == 0:
        lane = D
        g_row = gamma.reshape(1, D)
    else:
        lane = (D * 128) // math.gcd(D, 128)  # lcm(D, 128)
        if total % lane == 0 and lane * itemsize <= _MAX_FOLD_LANE_BYTES:
            # Each folded row holds lane//D complete D-vectors back-to-back,
            # so tiling gamma lane//D times keeps the product exact.
            g_row = jnp.tile(gamma, lane // D).reshape(1, lane)
        else:
            # Legal fallback: last block dim equal to the full array dim.
            # TODO(synk): for a ragged total, processing the largest
            # lcm-divisible prefix lane-dense + a plain-jnp remainder would
            # avoid masked stores, but the required concatenate adds a full
            # extra HBM pass over the prefix, so it is not done here.
            lane = D
            g_row = gamma.reshape(1, D)

    rows = total // lane
    x2 = x.reshape(rows, lane)

    # --- choose the row tile (big, multiple of the sublane tile) ----------
    sub = max(8, 32 // itemsize)  # 8 for f32, 16 for bf16, 32 for int8
    tile_rows = (target_block_bytes // (lane * itemsize)) // sub * sub
    tile_rows = max(sub, tile_rows)
    if tile_rows >= rows:
        if min_blocks > 1 and rows >= min_blocks * sub:
            # Split an "everything fits in one block" tensor into ~min_blocks
            # blocks so megacore (v7x) can shard the parallel axis.
            tile_rows = max(sub, pl.cdiv(pl.cdiv(rows, min_blocks), sub) * sub)
        else:
            tile_rows = rows  # single full-array block (always legal)
    grid = (pl.cdiv(rows, tile_rows),)  # ragged last block handled by Pallas

    block = (tile_rows, lane)
    block_bytes = tile_rows * lane * itemsize
    gamma_bytes = lane * 4  # gamma row kept in f32

    # VMEM budget: 2x double-buffered input + 2x output + 2x gamma + headroom.
    vmem_limit = int(4 * block_bytes + 2 * gamma_bytes + (4 << 20))

    cost = pl.CostEstimate(
        flops=total,
        transcendentals=0,
        bytes_accessed=2 * total * itemsize + D * 4,
    )

    out = pl.pallas_call(
        layerscale_kernel,
        out_shape=jax.ShapeDtypeStruct((rows, lane), out_dtype),
        grid_spec=pltpu.PrefetchScalarGridSpec(
            num_scalar_prefetch=0,
            grid=grid,
            in_specs=[
                pl.BlockSpec(block, lambda i: (i, 0)),
                pl.BlockSpec((1, lane), lambda i: (0, 0)),
            ],
            out_specs=pl.BlockSpec(block, lambda i: (i, 0)),
        ),
        compiler_params=pltpu.CompilerParams(
            dimension_semantics=("parallel",),
            vmem_limit_bytes=vmem_limit,
        ),
        cost_estimate=cost,
    )(x2, g_row)

    # TODO(synk): the only order-of-magnitude win left is fusing this multiply
    # into the producer/consumer kernel's epilogue (removes a full read+write
    # HBM pass); as a standalone op it is already at/near HBM roofline.
    return out.reshape(orig_shape)


if __name__ == "__main__":
    key = jax.random.PRNGKey(0)
    init_values = 1e-5

    # --- primary check: module config dim=32, init_values=1e-5 -------------
    B, N, dim = 2, 8, 32
    x = jax.random.normal(key, (B, N, dim), dtype=jnp.float32)
    # Deterministic parameter init, exactly as in __init__: init_values * ones
    gamma = init_values * jnp.ones((dim,), dtype=jnp.float32)
    y = jax.block_until_ready(layer_scale(x, gamma))
    y_ref = x * gamma
    assert y.shape == x.shape and y.dtype == x.dtype
    assert jnp.allclose(y, y_ref, rtol=1e-6, atol=1e-6)

    # --- ragged grid + non-128-multiple-D fallback path ---------------------
    k1, k2 = jax.random.split(key)
    x_r = jax.random.normal(k1, (3, 7, 160), dtype=jnp.float32)
    g_r = init_values * jnp.ones((160,), dtype=jnp.float32)
    y_r = jax.block_until_ready(layer_scale(x_r, g_r, target_block_bytes=4096))
    assert jnp.allclose(y_r, x_r * g_r, rtol=1e-6, atol=1e-6)

    # --- bf16 input: dtype preserved, product computed in f32 ---------------
    x_b = jax.random.normal(k2, (2, 8, 256), dtype=jnp.float32).astype(jnp.bfloat16)
    g_b = init_values * jnp.ones((256,), dtype=jnp.float32)
    y_b = jax.block_until_ready(layer_scale(x_b, g_b))
    y_b_ref = (x_b.astype(jnp.float32) * g_b).astype(jnp.bfloat16)
    assert y_b.dtype == jnp.bfloat16
    assert jnp.allclose(y_b.astype(jnp.float32), y_b_ref.astype(jnp.float32),
                        rtol=1e-2, atol=1e-6)

    print("KERNEL_OK")
</pallas_src>

<mosaic_0001>
module attributes {stable_mosaic.version = 11 : i64} {
  func.func @layerscale_kernel(%arg0: i32, %arg1: memref<4x128xf32, #tpu.memory_space<vmem>>, %arg2: memref<1x128xf32, #tpu.memory_space<vmem>>, %arg3: memref<4x128xf32, #tpu.memory_space<vmem>>) attributes {dimension_semantics = [#tpu.dimension_semantics<parallel>], iteration_bounds = array<i64: 1>, scalar_prefetch = 0 : i64, scratch_operands = 0 : i64, tpu.core_type = #tpu.core_type<tc>, window_params = [{transform_indices = @transform_0, window_bounds = array<i64: 4, 128>}, {pipeline_mode = #tpu.pipeline_mode<synchronous>, transform_indices = @transform_1, window_bounds = array<i64: 1, 128>}, {transform_indices = @transform_2, window_bounds = array<i64: 4, 128>}]} {
    %c0 = arith.constant 0 : index
    %c0_0 = arith.constant 0 : index
    %0 = vector.load %arg1[%c0, %c0_0] : memref<4x128xf32, #tpu.memory_space<vmem>>, vector<4x128xf32>
    %c0_1 = arith.constant 0 : index
    %c0_2 = arith.constant 0 : index
    %1 = vector.load %arg2[%c0_1, %c0_2] : memref<1x128xf32, #tpu.memory_space<vmem>>, vector<1x128xf32>
    %2 = vector.broadcast %1 : vector<1x128xf32> to vector<4x128xf32>
    %3 = arith.mulf %0, %2 : vector<4x128xf32>
    %c0_3 = arith.constant 0 : index
    %c0_4 = arith.constant 0 : index
    %4 = vector.load %arg3[%c0_3, %c0_4] : memref<4x128xf32, #tpu.memory_space<vmem>>, vector<4x128xf32>
    tpu.vector_store %arg3[%c0_3, %c0_4], %3 {strides = array<i32>} : memref<4x128xf32, #tpu.memory_space<vmem>>, vector<4x128xf32>,
    return
  }
  func.func @transform_0(%arg0: i32) -> (i32, i32) {
    %c0_i32 = arith.constant 0 : i32
    %c0_i32_0 = arith.constant 0 : i32
    return %arg0, %c0_i32 : i32, i32
  }
  func.func @transform_1(%arg0: i32) -> (i32, i32) {
    %c0_i32 = arith.constant 0 : i32
    %c0_i32_0 = arith.constant 0 : i32
    %c0_i32_1 = arith.constant 0 : i32
    return %c0_i32, %c0_i32_0 : i32, i32
  }
  func.func @transform_2(%arg0: i32) -> (i32, i32) {
    %c0_i32 = arith.constant 0 : i32
    %c0_i32_0 = arith.constant 0 : i32
    return %arg0, %c0_i32 : i32, i32
  }
}

</mosaic_0001>

<llo_original>
// kernel: tpu_custom_call.1
$region0: #{tpu_custom_call.1}
  #allocation0 [shape = 'u32[]', space=smem, size = 0x4, offset = 0x4, fixed_abs, tag = 'smem constant byte address 0x4 - core index']
  #allocation1 [shape = 'u32[144,128]{1,0:T(1,128)}', space=vmem, size = 0x12000, scoped, tag = 'internal scratch']
  %s0 = inlined_call_operand.hbm [shape: f32[4,128], index: 0, kind: input, shape index: {}]
  %s1 = inlined_call_operand.vmem [shape: f32[1,128], index: 1, kind: input, shape index: {}]
  %s2 = inlined_call_operand.hbm [shape: f32[4,128], index: 2, kind: output, shape index: {}]
  %s3 = sld [smem:[#allocation0]]
  $region22: #{tpu_custom_call.1} parent=0
    _
  %s5 = ssub.s32 1, %s3
  %s6 = scalar_select 0, %s5, %s3
  $region1: #{tpu_custom_call.1} parent=0
    #allocation2 [shape = 'u8[2048]{0}', space=vmem, size = 0x800, scoped, tag = 'input window, operand 0, single buffered']
    #allocation3 [shape = 's32[1]{0}', space=sflag, size = 0x4, scoped, tag = 'scoped memory for tpu_custom_call.1']
    #allocation4 [shape = 's32[1]{0}', space=sflag, size = 0x4, scoped, tag = 'scoped memory for tpu_custom_call.1']
    #allocation5 [shape = 'u8[2048]{0}', space=vmem, size = 0x800, scoped, tag = 'output window, operand 0, single buffered']
    %7 = vsyncpa [#allocation3], 0
    %8 = vsyncpa [#allocation4], 0
    // Predicated region
    $region2: #{tpu_custom_call.1} parent=1 // pred_check
      _
    $region3: #{tpu_custom_call.1} parent=1 // pred_check_branch
      %10 = sbr.rel (0) target = $region5
    $region4: #{tpu_custom_call.1} parent=1 // pred_region
      %s12 = ssub.s32 64, 64
      %13 = vsyncadd [#allocation3], %s12
      %s15 = sshll.u32 [#allocation2], 4
      %s16 = int_to_ptr.vmem [resolvable:$true] %s15
      %18 = dma.hbm_to_vmem [thread:$0]  %s0, 64, %s16, [#allocation3]
    $region5: #{tpu_custom_call.1} parent=1 // pred_fallthru
      _
    // Predicated region
    $region6: #{tpu_custom_call.1} parent=1 // pred_check
      _
    $region7: #{tpu_custom_call.1} parent=1 // pred_check_branch
      %20 = sbr.rel (0) target = $region9
    $region8: #{tpu_custom_call.1} parent=1 // pred_region
      _
    $region9: #{tpu_custom_call.1} parent=1 // pred_fallthru
      _
    // Predicated region
    $region10: #{tpu_custom_call.1} parent=1 // pred_check
      _
    $region11: #{tpu_custom_call.1} parent=1 // pred_check_branch
      %22 = sbr.rel (0) target = $region13
    $region12: #{tpu_custom_call.1} parent=1 // pred_region
      %23 = dma.done [#allocation3], 64
    $region13: #{tpu_custom_call.1} parent=1 // pred_fallthru
      _
    %v24 = vld [vmem:[#allocation2] sm:$0xf]
    %v25 = vld [vmem:[%s1] sm:$0x1]
    %v27 = vlaneseq
    %v28 = vshrl.u32 %v27, 7
    %v29 = vsub.s32 0, %v28
    %v30 = vrot.slane %v25, %v29
    %v32 = vmul.f32 %v24, %v30
    %33 = vst [vmem:[#allocation5] sm:$0xf] %v32
    // Predicated region
    $region14: #{tpu_custom_call.1} parent=1 // pred_check
      _
    $region15: #{tpu_custom_call.1} parent=1 // pred_check_branch
      %35 = sbr.rel (0) target = $region17
    $region16: #{tpu_custom_call.1} parent=1 // pred_region
      %s37 = ssub.s32 64, 64
      %38 = vsyncadd [#allocation4], %s37
      %s40 = sshll.u32 [#allocation5], 4
      %s41 = int_to_ptr.vmem [resolvable:$true] %s40
      %43 = dma.vmem_to_hbm [thread:$0]  %s41, 64, %s2, [#allocation4]
    $region17: #{tpu_custom_call.1} parent=1 // pred_fallthru
      _
    // Predicated region
    $region18: #{tpu_custom_call.1} parent=1 // pred_check
      _
    $region19: #{tpu_custom_call.1} parent=1 // pred_check_branch
      %45 = sbr.rel (0) target = $region21
    $region20: #{tpu_custom_call.1} parent=1 // pred_region
      %46 = dma.done [#allocation4], 64
    $region21: #{tpu_custom_call.1} parent=1 // pred_fallthru
      _
    %47 = vsyncpa [#allocation3], 1
    %48 = vsyncpa [#allocation4], 1

</llo_original>
